<compile_context>
chip_gen: v7x
topology: tpu7x:2x2x1
jax: 0.10.0
libtpu: 0.0.40
codegen_flags: <defaults>
</compile_context>

<pallas_src>
import functools
import math

import jax
import jax.numpy as jnp
import numpy as np
from jax import lax
from jax.experimental import pallas as pl
from jax.experimental.pallas import tpu as pltpu


# ----------------------------- in-kernel helpers -----------------------------

def _patch_allreduce(v, p):
    """Sum over each aligned group of `p` consecutive lanes of the last axis,
    broadcast back to every lane of its group.  Exact f32; uses XLU rolls.
    v: (..., Wt) with Wt % p == 0 and patches aligned to the tile start."""
    if p == 1:
        return v
    wt = v.shape[-1]
    ax = v.ndim - 1
    lane = lax.broadcasted_iota(jnp.int32, v.shape, ax).astype(jnp.float32)
    pos = lane - jnp.floor(lane / p) * p          # lane position within its patch

    def rot(u, s):
        # group-local rotation by +s: out[pos] = u[(pos + s) mod p]
        fwd = pltpu.roll(u, shift=wt - s, axis=ax)   # value from lane w + s
        bwd = pltpu.roll(u, shift=p - s, axis=ax)    # value from lane w + s - p
        return jnp.where(pos < (p - s), fwd, bwd)

    if (p & (p - 1)) == 0:                        # power of two: recursive doubling
        s = 1
        while s < p:
            v = v + rot(v, s)
            s *= 2
    else:                                         # general p: p-1 single rotations
        acc, cur = v, v
        for _ in range(p - 1):
            cur = rot(cur, 1)
            acc = acc + cur
        v = acc
    return v


def _normalize_target_patches(t, p):
    """Per-patch (all C channels x p consecutive W positions) mean / unbiased
    variance normalization of a (B, C, Wt) f32 tile (Wt % p == 0).  Matches
    torch patchify -> (x - mean) / sqrt(var + 1e-6) -> unpatchify, computed
    directly in NCW layout (no transposes, no reshapes)."""
    C = t.shape[1]
    n = C * p
    csum = jnp.sum(t, axis=1)                               # (B, Wt)
    mean_w = _patch_allreduce(csum, p) * (1.0 / n)          # (B, Wt)
    centered = t - mean_w[:, None, :]                       # (B, C, Wt)
    csum2 = jnp.sum(centered * centered, axis=1)            # (B, Wt)
    var_w = _patch_allreduce(csum2, p) * (1.0 / (n - 1))    # unbiased (torch default)
    rstd_w = lax.rsqrt(var_w + 1e-6)                        # EUP rsqrt, free slot
    return centered * rstd_w[:, None, :]


# ------------------------------- Pallas kernels -------------------------------

def _masked_loss_kernel(x_ref, t_ref, m_ref, out_ref, num_acc, den_acc,
                        *, p, norm_pix):
    j = pl.program_id(0)

    @pl.when(j == 0)
    def _init():
        num_acc[...] = jnp.zeros_like(num_acc)
        den_acc[...] = jnp.zeros_like(den_acc)

    x = x_ref[...].astype(jnp.float32)            # (B, C, Wt)
    t = t_ref[...].astype(jnp.float32)            # (B, C, Wt)
    m = m_ref[...].astype(jnp.float32)            # (B, Wt)
    C = x.shape[1]

    if norm_pix:
        t = _normalize_target_patches(t, p)

    diff = x - t
    loss_bw = jnp.sum(diff * diff, axis=1) * (1.0 / C)              # loss.mean(dim=1)
    num_acc[...] += jnp.sum(loss_bw * m, axis=-1, keepdims=True)    # (B, 1)
    den_acc[...] += jnp.sum(m, axis=-1, keepdims=True)              # (B, 1)

    @pl.when(j == pl.num_programs(0) - 1)
    def _finalize():
        num = num_acc[...]
        den = den_acc[...]
        valid = den > 0.0
        per = jnp.where(valid, num / jnp.where(valid, den, 1.0), 0.0)   # (B, 1)
        cnt = jnp.sum(jnp.where(valid, 1.0, 0.0), axis=0, keepdims=True)
        tot = jnp.sum(per, axis=0, keepdims=True)
        # nanmean over batches; returns 0 when every batch mask is empty
        # (matches the torch `mask.sum() == 0` early return).
        out_ref[...] = tot / jnp.maximum(cnt, 1.0)


def _mean_loss_kernel(x_ref, t_ref, out_ref, acc, *, p, norm_pix, inv_total):
    j = pl.program_id(0)

    @pl.when(j == 0)
    def _init():
        acc[...] = jnp.zeros_like(acc)

    x = x_ref[...].astype(jnp.float32)            # (B, C, Wt)
    t = t_ref[...].astype(jnp.float32)
    if norm_pix:
        t = _normalize_target_patches(t, p)

    diff = x - t
    sq_bw = jnp.sum(diff * diff, axis=1)                            # (B, Wt)
    acc[...] += jnp.sum(jnp.sum(sq_bw, axis=-1, keepdims=True),
                        axis=0, keepdims=True)                      # (1, 1)

    @pl.when(j == pl.num_programs(0) - 1)
    def _finalize():
        out_ref[...] = acc[...] * inv_total


# ------------------------------- tile selection --------------------------------

def _pick_w_tile(W, p, B, C, itemsize, norm_pix,
                 budget_bytes=16 * 1024 * 1024, max_tile=2048):
    """Largest lane-aligned W tile that divides W, keeps whole patches per tile
    (norm_pix) and whose double-buffered working set fits a conservative VMEM
    budget (valid for v5e / v6e / v7x)."""
    unit = (128 * p) // math.gcd(128, p) if norm_pix else 128

    def footprint(wt):
        dbuf = 2 * (2 * B * C * wt * itemsize + B * wt * 4)   # x, t, mask x 2 buffers
        temps = 4 * B * C * wt * 4                            # f32 body temporaries
        return dbuf + temps

    best = None
    wt = unit
    while wt <= min(W, max_tile):
        if W % wt == 0 and footprint(wt) <= budget_bytes:
            best = wt
        wt += unit
    # small or awkward widths: single whole-width block (allowed by BlockSpec).
    return best if best is not None else W


# -------------------------------- module wrapper --------------------------------

class MaskedMSELoss:
    """MSE loss with masking (fused Pallas TPU version of the PyTorch module)."""

    def __init__(self, patch_size: int = 16, stride: int = 1, norm_pix=False):
        self.patch_size = patch_size
        self.stride = stride
        self.scale_factor = patch_size // stride
        self.norm_pix = norm_pix

    def __call__(self, input, target, mask=None):
        B, C, W = input.shape
        p = self.scale_factor
        if self.norm_pix and W % p != 0:
            raise ValueError("W must be divisible by patch_size // stride")

        wt = _pick_w_tile(W, p, B, C, jnp.dtype(input.dtype).itemsize,
                          self.norm_pix)
        grid = (W // wt,)
        # NOTE: with a larger batch, a leading "parallel" batch-block axis would
        # let v7x's two TensorCores split the work; scalar output keeps one axis.
        cparams = pltpu.CompilerParams(
            dimension_semantics=("arbitrary",),          # W tiles are a reduction
            vmem_limit_bytes=32 * 1024 * 1024,
        )
        x_spec = pl.BlockSpec((B, C, wt), lambda j: (0, 0, j))
        out_spec = pl.BlockSpec((1, 1), lambda j: (0, 0))

        if mask is None:
            kern = functools.partial(_mean_loss_kernel, p=p,
                                     norm_pix=self.norm_pix,
                                     inv_total=1.0 / float(B * C * W))
            out = pl.pallas_call(
                kern,
                out_shape=jax.ShapeDtypeStruct((1, 1), jnp.float32),
                grid_spec=pltpu.PrefetchScalarGridSpec(
                    num_scalar_prefetch=0,
                    grid=grid,
                    in_specs=[x_spec, x_spec],
                    out_specs=out_spec,
                    scratch_shapes=[pltpu.VMEM((1, 1), jnp.float32)],
                ),
                compiler_params=cparams,
            )(input, target)
            return out[0, 0]

        # Nearest-neighbour upsample of the mask to width W (matches
        # F.interpolate(mode='nearest')).  Tiny XLA gather: ~1/(2C) of the
        # kernel's HBM traffic, kept outside the kernel for simplicity.
        Wm = mask.shape[-1]
        idx = (jnp.arange(W) * Wm) // W
        mask_up = jnp.asarray(mask).astype(jnp.float32)[:, idx]     # (B, W)

        kern = functools.partial(_masked_loss_kernel, p=p,
                                 norm_pix=self.norm_pix)
        out = pl.pallas_call(
            kern,
            out_shape=jax.ShapeDtypeStruct((1, 1), jnp.float32),
            grid_spec=pltpu.PrefetchScalarGridSpec(
                num_scalar_prefetch=0,
                grid=grid,
                in_specs=[x_spec, x_spec,
                          pl.BlockSpec((B, wt), lambda j: (0, j))],
                out_specs=out_spec,
                scratch_shapes=[pltpu.VMEM((B, 1), jnp.float32),
                                pltpu.VMEM((B, 1), jnp.float32)],
            ),
            compiler_params=cparams,
        )(input, target, mask_up)
        # mask.sum() == 0  ->  all per-batch denominators are 0 -> the kernel
        # already returns 0, matching the torch early-return.
        return out[0, 0]


# ------------------------------ pure-JAX reference ------------------------------

def _ref_forward(mod, x, t, mask=None):
    p = mod.scale_factor
    B, C, W = x.shape
    nw = W // p
    xx = x.astype(jnp.float32)
    tt = t.astype(jnp.float32)
    if mod.norm_pix:
        tp = tt.reshape(B, C, nw, p).transpose(0, 2, 3, 1).reshape(B, nw, p * C)
        mean = tp.mean(-1, keepdims=True)
        var = tp.var(-1, keepdims=True, ddof=1)
        tp = (tp - mean) / jnp.sqrt(var + 1e-6)
        tt = tp.reshape(B, nw, p, C).transpose(0, 3, 1, 2).reshape(B, C, W)
    loss = (xx - tt) ** 2
    if mask is None:
        return loss.mean()
    if float(mask.sum()) == 0:
        return jnp.zeros(())
    Wm = mask.shape[-1]
    idx = (jnp.arange(W) * Wm) // W
    m = mask.astype(jnp.float32)[:, idx]
    l = loss.mean(axis=1) * m
    per = l.sum(axis=1) / m.sum(axis=1)
    return jnp.nanmean(per)


# ------------------------------------- main --------------------------------------

if __name__ == "__main__":
    key = jax.random.PRNGKey(0)
    k1, k2, k3, k4, k5, k6 = jax.random.split(key, 6)

    # small case (single whole-width block)
    B, C, W = 2, 4, 32
    x = jax.random.normal(k1, (B, C, W), jnp.float32)
    t = jax.random.normal(k2, (B, C, W), jnp.float32)
    mask = (jax.random.uniform(k3, (B, 8)) > 0.3).astype(jnp.float32)

    mod_norm = MaskedMSELoss(patch_size=16, stride=1, norm_pix=True)
    mod_plain = MaskedMSELoss(patch_size=16, stride=1, norm_pix=False)

    o1 = jax.block_until_ready(mod_norm(x, t, mask))
    o2 = jax.block_until_ready(mod_plain(x, t))
    o3 = jax.block_until_ready(mod_plain(x, t, mask))
    assert np.allclose(np.asarray(o1), np.asarray(_ref_forward(mod_norm, x, t, mask)),
                       rtol=1e-5, atol=1e-5)
    assert np.allclose(np.asarray(o2), np.asarray(_ref_forward(mod_plain, x, t)),
                       rtol=1e-5, atol=1e-5)
    assert np.allclose(np.asarray(o3), np.asarray(_ref_forward(mod_plain, x, t, mask)),
                       rtol=1e-5, atol=1e-5)

    # all-zero mask -> 0 (torch early return)
    zmask = jnp.zeros((B, 8), jnp.float32)
    o0 = jax.block_until_ready(mod_norm(x, t, zmask))
    assert np.allclose(np.asarray(o0), 0.0)

    # larger case exercising the tiled W grid (multi-step accumulation)
    B2, C2, W2 = 2, 4, 8192
    x2 = jax.random.normal(k4, (B2, C2, W2), jnp.float32)
    t2 = jax.random.normal(k5, (B2, C2, W2), jnp.float32)
    mask2 = (jax.random.uniform(k6, (B2, W2 // 16)) > 0.5).astype(jnp.float32)
    o4 = jax.block_until_ready(mod_norm(x2, t2, mask2))
    o5 = jax.block_until_ready(mod_plain(x2, t2))
    assert np.allclose(np.asarray(o4), np.asarray(_ref_forward(mod_norm, x2, t2, mask2)),
                       rtol=2e-4, atol=1e-5)
    assert np.allclose(np.asarray(o5), np.asarray(_ref_forward(mod_plain, x2, t2)),
                       rtol=2e-4, atol=1e-5)

    print("KERNEL_OK")
</pallas_src>

<mosaic_0001>
module attributes {stable_mosaic.version = 11 : i64} {
  func.func @_masked_loss_kernel(%arg0: i32, %arg1: memref<2x4x32xf32, #tpu.memory_space<vmem>>, %arg2: memref<2x4x32xf32, #tpu.memory_space<vmem>>, %arg3: memref<2x32xf32, #tpu.memory_space<vmem>>, %arg4: memref<1x1xf32, #tpu.memory_space<vmem>>, %arg5: memref<2x1xf32, #tpu.memory_space<vmem>>, %arg6: memref<2x1xf32, #tpu.memory_space<vmem>>) attributes {dimension_semantics = [#tpu.dimension_semantics<arbitrary>], iteration_bounds = array<i64: 1>, scalar_prefetch = 0 : i64, scratch_operands = 2 : i64, tpu.core_type = #tpu.core_type<tc>, window_params = [{transform_indices = @transform_0, window_bounds = array<i64: 2, 4, 32>}, {transform_indices = @transform_1, window_bounds = array<i64: 2, 4, 32>}, {transform_indices = @transform_2, window_bounds = array<i64: 2, 32>}, {pipeline_mode = #tpu.pipeline_mode<synchronous>, transform_indices = @transform_3, window_bounds = array<i64: 1, 1>}]} {
    %c0_i32 = arith.constant 0 : i32
    %0 = arith.cmpi eq, %arg0, %c0_i32 : i32
    %1 = arith.extui %0 : i1 to i32
    %c0_i32_0 = arith.constant 0 : i32
    %2 = arith.cmpi ne, %1, %c0_i32_0 : i32
    scf.if %2 {
      %cst_46 = arith.constant 0.000000e+00 : f32
      %105 = vector.broadcast %cst_46 : f32 to vector<2x1xf32>
      %c0_47 = arith.constant 0 : index
      %c0_48 = arith.constant 0 : index
      %106 = vector.load %arg5[%c0_47, %c0_48] : memref<2x1xf32, #tpu.memory_space<vmem>>, vector<2x1xf32>
      tpu.vector_store %arg5[%c0_47, %c0_48], %105 {strides = array<i32>} : memref<2x1xf32, #tpu.memory_space<vmem>>, vector<2x1xf32>,
      %cst_49 = arith.constant 0.000000e+00 : f32
      %107 = vector.broadcast %cst_49 : f32 to vector<2x1xf32>
      %c0_50 = arith.constant 0 : index
      %c0_51 = arith.constant 0 : index
      %108 = vector.load %arg6[%c0_50, %c0_51] : memref<2x1xf32, #tpu.memory_space<vmem>>, vector<2x1xf32>
      tpu.vector_store %arg6[%c0_50, %c0_51], %107 {strides = array<i32>} : memref<2x1xf32, #tpu.memory_space<vmem>>, vector<2x1xf32>,
    } else {
    }
    %c0 = arith.constant 0 : index
    %c0_1 = arith.constant 0 : index
    %c0_2 = arith.constant 0 : index
    %3 = vector.load %arg1[%c0, %c0_1, %c0_2] : memref<2x4x32xf32, #tpu.memory_space<vmem>>, vector<2x4x32xf32>
    %c0_3 = arith.constant 0 : index
    %c0_4 = arith.constant 0 : index
    %c0_5 = arith.constant 0 : index
    %4 = vector.load %arg2[%c0_3, %c0_4, %c0_5] : memref<2x4x32xf32, #tpu.memory_space<vmem>>, vector<2x4x32xf32>
    %c0_6 = arith.constant 0 : index
    %c0_7 = arith.constant 0 : index
    %5 = vector.load %arg3[%c0_6, %c0_7] : memref<2x32xf32, #tpu.memory_space<vmem>>, vector<2x32xf32>
    %cst = arith.constant dense<0.000000e+00> : vector<2x32xf32>
    %6 = vector.multi_reduction <add>, %4, %cst [1] : vector<2x4x32xf32> to vector<2x32xf32>
    %7 = tpu.iota {dimensions = array<i32: 1>} : vector<2x32xi32>
    %8 = arith.sitofp %7 : vector<2x32xi32> to vector<2x32xf32>
    %cst_8 = arith.constant 1.600000e+01 : f32
    %9 = vector.broadcast %cst_8 : f32 to vector<2x32xf32>
    %10 = arith.divf %8, %9 : vector<2x32xf32>
    %11 = math.floor %10 : vector<2x32xf32>
    %cst_9 = arith.constant 1.600000e+01 : f32
    %12 = vector.broadcast %cst_9 : f32 to vector<2x32xf32>
    %13 = arith.mulf %11, %12 : vector<2x32xf32>
    %14 = arith.subf %8, %13 : vector<2x32xf32>
    %c31_i32 = arith.constant 31 : i32
    %15 = tpu.dynamic_rotate %6 by %c31_i32 dim 1 : vector<2x32xf32>, i32 -> vector<2x32xf32>
    %c15_i32 = arith.constant 15 : i32
    %16 = tpu.dynamic_rotate %6 by %c15_i32 dim 1 : vector<2x32xf32>, i32 -> vector<2x32xf32>
    %cst_10 = arith.constant 1.500000e+01 : f32
    %17 = vector.broadcast %cst_10 : f32 to vector<2x32xf32>
    %18 = arith.cmpf olt, %14, %17 : vector<2x32xf32>
    %19 = arith.select %18, %15, %16 : vector<2x32xi1>, vector<2x32xf32>
    %20 = arith.addf %6, %19 : vector<2x32xf32>
    %c30_i32 = arith.constant 30 : i32
    %21 = tpu.dynamic_rotate %20 by %c30_i32 dim 1 : vector<2x32xf32>, i32 -> vector<2x32xf32>
    %c14_i32 = arith.constant 14 : i32
    %22 = tpu.dynamic_rotate %20 by %c14_i32 dim 1 : vector<2x32xf32>, i32 -> vector<2x32xf32>
    %cst_11 = arith.constant 1.400000e+01 : f32
    %23 = vector.broadcast %cst_11 : f32 to vector<2x32xf32>
    %24 = arith.cmpf olt, %14, %23 : vector<2x32xf32>
    %25 = arith.select %24, %21, %22 : vector<2x32xi1>, vector<2x32xf32>
    %26 = arith.addf %20, %25 : vector<2x32xf32>
    %c28_i32 = arith.constant 28 : i32
    %27 = tpu.dynamic_rotate %26 by %c28_i32 dim 1 : vector<2x32xf32>, i32 -> vector<2x32xf32>
    %c12_i32 = arith.constant 12 : i32
    %28 = tpu.dynamic_rotate %26 by %c12_i32 dim 1 : vector<2x32xf32>, i32 -> vector<2x32xf32>
    %cst_12 = arith.constant 1.200000e+01 : f32
    %29 = vector.broadcast %cst_12 : f32 to vector<2x32xf32>
    %30 = arith.cmpf olt, %14, %29 : vector<2x32xf32>
    %31 = arith.select %30, %27, %28 : vector<2x32xi1>, vector<2x32xf32>
    %32 = arith.addf %26, %31 : vector<2x32xf32>
    %c24_i32 = arith.constant 24 : i32
    %33 = tpu.dynamic_rotate %32 by %c24_i32 dim 1 : vector<2x32xf32>, i32 -> vector<2x32xf32>
    %c8_i32 = arith.constant 8 : i32
    %34 = tpu.dynamic_rotate %32 by %c8_i32 dim 1 : vector<2x32xf32>, i32 -> vector<2x32xf32>
    %cst_13 = arith.constant 8.000000e+00 : f32
    %35 = vector.broadcast %cst_13 : f32 to vector<2x32xf32>
    %36 = arith.cmpf olt, %14, %35 : vector<2x32xf32>
    %37 = arith.select %36, %33, %34 : vector<2x32xi1>, vector<2x32xf32>
    %38 = arith.addf %32, %37 : vector<2x32xf32>
    %cst_14 = arith.constant 1.562500e-02 : f32
    %39 = vector.broadcast %cst_14 : f32 to vector<2x32xf32>
    %40 = arith.mulf %38, %39 : vector<2x32xf32>
    %41 = vector.shape_cast %40 : vector<2x32xf32> to vector<2x1x32xf32>
    %42 = vector.broadcast %41 : vector<2x1x32xf32> to vector<2x4x32xf32>
    %43 = arith.subf %4, %42 : vector<2x4x32xf32>
    %44 = arith.mulf %43, %43 : vector<2x4x32xf32>
    %cst_15 = arith.constant dense<0.000000e+00> : vector<2x32xf32>
    %45 = vector.multi_reduction <add>, %44, %cst_15 [1] : vector<2x4x32xf32> to vector<2x32xf32>
    %46 = tpu.iota {dimensions = array<i32: 1>} : vector<2x32xi32>
    %47 = arith.sitofp %46 : vector<2x32xi32> to vector<2x32xf32>
    %cst_16 = arith.constant 1.600000e+01 : f32
    %48 = vector.broadcast %cst_16 : f32 to vector<2x32xf32>
    %49 = arith.divf %47, %48 : vector<2x32xf32>
    %50 = math.floor %49 : vector<2x32xf32>
    %cst_17 = arith.constant 1.600000e+01 : f32
    %51 = vector.broadcast %cst_17 : f32 to vector<2x32xf32>
    %52 = arith.mulf %50, %51 : vector<2x32xf32>
    %53 = arith.subf %47, %52 : vector<2x32xf32>
    %c31_i32_18 = arith.constant 31 : i32
    %54 = tpu.dynamic_rotate %45 by %c31_i32_18 dim 1 : vector<2x32xf32>, i32 -> vector<2x32xf32>
    %c15_i32_19 = arith.constant 15 : i32
    %55 = tpu.dynamic_rotate %45 by %c15_i32_19 dim 1 : vector<2x32xf32>, i32 -> vector<2x32xf32>
    %cst_20 = arith.constant 1.500000e+01 : f32
    %56 = vector.broadcast %cst_20 : f32 to vector<2x32xf32>
    %57 = arith.cmpf olt, %53, %56 : vector<2x32xf32>
    %58 = arith.select %57, %54, %55 : vector<2x32xi1>, vector<2x32xf32>
    %59 = arith.addf %45, %58 : vector<2x32xf32>
    %c30_i32_21 = arith.constant 30 : i32
    %60 = tpu.dynamic_rotate %59 by %c30_i32_21 dim 1 : vector<2x32xf32>, i32 -> vector<2x32xf32>
    %c14_i32_22 = arith.constant 14 : i32
    %61 = tpu.dynamic_rotate %59 by %c14_i32_22 dim 1 : vector<2x32xf32>, i32 -> vector<2x32xf32>
    %cst_23 = arith.constant 1.400000e+01 : f32
    %62 = vector.broadcast %cst_23 : f32 to vector<2x32xf32>
    %63 = arith.cmpf olt, %53, %62 : vector<2x32xf32>
    %64 = arith.select %63, %60, %61 : vector<2x32xi1>, vector<2x32xf32>
    %65 = arith.addf %59, %64 : vector<2x32xf32>
    %c28_i32_24 = arith.constant 28 : i32
    %66 = tpu.dynamic_rotate %65 by %c28_i32_24 dim 1 : vector<2x32xf32>, i32 -> vector<2x32xf32>
    %c12_i32_25 = arith.constant 12 : i32
    %67 = tpu.dynamic_rotate %65 by %c12_i32_25 dim 1 : vector<2x32xf32>, i32 -> vector<2x32xf32>
    %cst_26 = arith.constant 1.200000e+01 : f32
    %68 = vector.broadcast %cst_26 : f32 to vector<2x32xf32>
    %69 = arith.cmpf olt, %53, %68 : vector<2x32xf32>
    %70 = arith.select %69, %66, %67 : vector<2x32xi1>, vector<2x32xf32>
    %71 = arith.addf %65, %70 : vector<2x32xf32>
    %c24_i32_27 = arith.constant 24 : i32
    %72 = tpu.dynamic_rotate %71 by %c24_i32_27 dim 1 : vector<2x32xf32>, i32 -> vector<2x32xf32>
    %c8_i32_28 = arith.constant 8 : i32
    %73 = tpu.dynamic_rotate %71 by %c8_i32_28 dim 1 : vector<2x32xf32>, i32 -> vector<2x32xf32>
    %cst_29 = arith.constant 8.000000e+00 : f32
    %74 = vector.broadcast %cst_29 : f32 to vector<2x32xf32>
    %75 = arith.cmpf olt, %53, %74 : vector<2x32xf32>
    %76 = arith.select %75, %72, %73 : vector<2x32xi1>, vector<2x32xf32>
    %77 = arith.addf %71, %76 : vector<2x32xf32>
    %cst_30 = arith.constant 0.0158730168 : f32
    %78 = vector.broadcast %cst_30 : f32 to vector<2x32xf32>
    %79 = arith.mulf %77, %78 : vector<2x32xf32>
    %cst_31 = arith.constant 9.99999997E-7 : f32
    %80 = vector.broadcast %cst_31 : f32 to vector<2x32xf32>
    %81 = arith.addf %79, %80 : vector<2x32xf32>
    %82 = math.rsqrt %81 : vector<2x32xf32>
    %83 = vector.shape_cast %82 : vector<2x32xf32> to vector<2x1x32xf32>
    %84 = vector.broadcast %83 : vector<2x1x32xf32> to vector<2x4x32xf32>
    %85 = arith.mulf %43, %84 : vector<2x4x32xf32>
    %86 = arith.subf %3, %85 : vector<2x4x32xf32>
    %87 = arith.mulf %86, %86 : vector<2x4x32xf32>
    %cst_32 = arith.constant dense<0.000000e+00> : vector<2x32xf32>
    %88 = vector.multi_reduction <add>, %87, %cst_32 [1] : vector<2x4x32xf32> to vector<2x32xf32>
    %cst_33 = arith.constant 2.500000e-01 : f32
    %89 = vector.broadcast %cst_33 : f32 to vector<2x32xf32>
    %90 = arith.mulf %88, %89 : vector<2x32xf32>
    %c0_34 = arith.constant 0 : index
    %c0_35 = arith.constant 0 : index
    %91 = vector.load %arg5[%c0_34, %c0_35] : memref<2x1xf32, #tpu.memory_space<vmem>>, vector<2x1xf32>
    %92 = arith.mulf %90, %5 : vector<2x32xf32>
    %cst_36 = arith.constant dense<0.000000e+00> : vector<2xf32>
    %93 = vector.multi_reduction <add>, %92, %cst_36 [1] : vector<2x32xf32> to vector<2xf32>
    %94 = vector.shape_cast %93 : vector<2xf32> to vector<2x1xf32>
    %95 = arith.addf %91, %94 : vector<2x1xf32>
    %c0_37 = arith.constant 0 : index
    %c0_38 = arith.constant 0 : index
    %96 = vector.load %arg5[%c0_37, %c0_38] : memref<2x1xf32, #tpu.memory_space<vmem>>, vector<2x1xf32>
    tpu.vector_store %arg5[%c0_37, %c0_38], %95 {strides = array<i32>} : memref<2x1xf32, #tpu.memory_space<vmem>>, vector<2x1xf32>,
    %c0_39 = arith.constant 0 : index
    %c0_40 = arith.constant 0 : index
    %97 = vector.load %arg6[%c0_39, %c0_40] : memref<2x1xf32, #tpu.memory_space<vmem>>, vector<2x1xf32>
    %cst_41 = arith.constant dense<0.000000e+00> : vector<2xf32>
    %98 = vector.multi_reduction <add>, %5, %cst_41 [1] : vector<2x32xf32> to vector<2xf32>
    %99 = vector.shape_cast %98 : vector<2xf32> to vector<2x1xf32>
    %100 = arith.addf %97, %99 : vector<2x1xf32>
    %c0_42 = arith.constant 0 : index
    %c0_43 = arith.constant 0 : index
    %101 = vector.load %arg6[%c0_42, %c0_43] : memref<2x1xf32, #tpu.memory_space<vmem>>, vector<2x1xf32>
    tpu.vector_store %arg6[%c0_42, %c0_43], %100 {strides = array<i32>} : memref<2x1xf32, #tpu.memory_space<vmem>>, vector<2x1xf32>,
    %c0_i32_44 = arith.constant 0 : i32
    %102 = arith.cmpi eq, %arg0, %c0_i32_44 : i32
    %103 = arith.extui %102 : i1 to i32
    %c0_i32_45 = arith.constant 0 : i32
    %104 = arith.cmpi ne, %103, %c0_i32_45 : i32
    scf.if %104 {
      %c0_46 = arith.constant 0 : index
      %c0_47 = arith.constant 0 : index
      %105 = vector.load %arg5[%c0_46, %c0_47] : memref<2x1xf32, #tpu.memory_space<vmem>>, vector<2x1xf32>
      %c0_48 = arith.constant 0 : index
      %c0_49 = arith.constant 0 : index
      %106 = vector.load %arg6[%c0_48, %c0_49] : memref<2x1xf32, #tpu.memory_space<vmem>>, vector<2x1xf32>
      %cst_50 = arith.constant 0.000000e+00 : f32
      %107 = vector.broadcast %cst_50 : f32 to vector<2x1xf32>
      %108 = arith.cmpf ogt, %106, %107 : vector<2x1xf32>
      %cst_51 = arith.constant 1.000000e+00 : f32
      %109 = vector.broadcast %cst_51 : f32 to vector<2x1xf32>
      %110 = arith.select %108, %106, %109 : vector<2x1xi1>, vector<2x1xf32>
      %111 = arith.divf %105, %110 : vector<2x1xf32>
      %cst_52 = arith.constant 0.000000e+00 : f32
      %112 = vector.broadcast %cst_52 : f32 to vector<2x1xf32>
      %113 = arith.select %108, %111, %112 : vector<2x1xi1>, vector<2x1xf32>
      %cst_53 = arith.constant 1.000000e+00 : f32
      %cst_54 = arith.constant 0.000000e+00 : f32
      %114 = vector.broadcast %cst_53 : f32 to vector<2x1xf32>
      %115 = vector.broadcast %cst_54 : f32 to vector<2x1xf32>
      %116 = arith.select %108, %114, %115 : vector<2x1xi1>, vector<2x1xf32>
      %cst_55 = arith.constant dense<0.000000e+00> : vector<1xf32>
      %117 = vector.multi_reduction <add>, %116, %cst_55 [0] : vector<2x1xf32> to vector<1xf32>
      %118 = vector.shape_cast %117 : vector<1xf32> to vector<1x1xf32>
      %cst_56 = arith.constant dense<0.000000e+00> : vector<1xf32>
      %119 = vector.multi_reduction <add>, %113, %cst_56 [0] : vector<2x1xf32> to vector<1xf32>
      %120 = vector.shape_cast %119 : vector<1xf32> to vector<1x1xf32>
      %cst_57 = arith.constant 1.000000e+00 : f32
      %121 = vector.broadcast %cst_57 : f32 to vector<1x1xf32>
      %122 = arith.maximumf %118, %121 : vector<1x1xf32>
      %123 = arith.divf %120, %122 : vector<1x1xf32>
      %c0_58 = arith.constant 0 : index
      %c0_59 = arith.constant 0 : index
      %124 = vector.load %arg4[%c0_58, %c0_59] : memref<1x1xf32, #tpu.memory_space<vmem>>, vector<1x1xf32>
      tpu.vector_store %arg4[%c0_58, %c0_59], %123 {strides = array<i32>} : memref<1x1xf32, #tpu.memory_space<vmem>>, vector<1x1xf32>,
    } else {
    }
    return
  }
  func.func @transform_0(%arg0: i32) -> (i32, i32, i32) {
    %c0_i32 = arith.constant 0 : i32
    %c0_i32_0 = arith.constant 0 : i32
    %c0_i32_1 = arith.constant 0 : i32
    return %c0_i32, %c0_i32_0, %arg0 : i32, i32, i32
  }
  func.func @transform_1(%arg0: i32) -> (i32, i32, i32) {
    %c0_i32 = arith.constant 0 : i32
    %c0_i32_0 = arith.constant 0 : i32
    %c0_i32_1 = arith.constant 0 : i32
    return %c0_i32, %c0_i32_0, %arg0 : i32, i32, i32
  }
  func.func @transform_2(%arg0: i32) -> (i32, i32) {
    %c0_i32 = arith.constant 0 : i32
    %c0_i32_0 = arith.constant 0 : i32
    return %c0_i32, %arg0 : i32, i32
  }
  func.func @transform_3(%arg0: i32) -> (i32, i32) {
    %c0_i32 = arith.constant 0 : i32
    %c0_i32_0 = arith.constant 0 : i32
    %c0_i32_1 = arith.constant 0 : i32
    return %c0_i32, %c0_i32_0 : i32, i32
  }
}

</mosaic_0001>

<llo_original>
// kernel: tpu_custom_call.1
$region0: #{tpu_custom_call.1}
  #allocation0 [shape = 'u32[]', space=smem, size = 0x4, offset = 0x4, fixed_abs, tag = 'smem constant byte address 0x4 - core index']
  #allocation1 [shape = 'u32[144,128]{1,0:T(1,128)}', space=vmem, size = 0x12000, scoped, tag = 'internal scratch']
  #allocation2 [shape = 'f32[2,1]{1,0:T(2,128)}', space=vmem, size = 0x400, scoped, tag = 'scratch operand']
  #allocation3 [shape = 'f32[2,1]{1,0:T(2,128)}', space=vmem, size = 0x400, scoped, tag = 'scratch operand']
  %s0 = inlined_call_operand.hbm [shape: f32[2,4,32], index: 0, kind: input, shape index: {}]
  %s1 = inlined_call_operand.hbm [shape: f32[2,4,32], index: 1, kind: input, shape index: {}]
  %s2 = inlined_call_operand.vmem [shape: f32[2,32], index: 2, kind: input, shape index: {}]
  %s3 = inlined_call_operand.hbm [shape: f32[1,1], index: 3, kind: output, shape index: {}]
  %s4 = sld [smem:[#allocation0]]
  $region38: #{tpu_custom_call.1} parent=0
    _
  %s6 = ssub.s32 1, %s4
  %s7 = scalar_select 0, %s6, %s4
  $region1: #{tpu_custom_call.1} parent=0
    #allocation4 [shape = 'u8[4096]{0}', space=vmem, size = 0x1000, scoped, tag = 'input window, operand 0, single buffered']
    #allocation5 [shape = 's32[1]{0}', space=sflag, size = 0x4, scoped, tag = 'scoped memory for tpu_custom_call.1']
    #allocation6 [shape = 's32[1]{0}', space=sflag, size = 0x4, scoped, tag = 'scoped memory for tpu_custom_call.1']
    #allocation7 [shape = 'u8[4096]{0}', space=vmem, size = 0x1000, scoped, tag = 'input window, operand 1, single buffered']
    #allocation8 [shape = 's32[1]{0}', space=sflag, size = 0x4, scoped, tag = 'scoped memory for tpu_custom_call.1']
    #allocation9 [shape = 'u8[512]{0}', space=vmem, size = 0x400, scoped, tag = 'output window, operand 0, single buffered']
    %8 = vsyncpa [#allocation5], 0
    %9 = vsyncpa [#allocation8], 0
    %10 = vsyncpa [#allocation6], 0
    // Predicated region
    $region2: #{tpu_custom_call.1} parent=1 // pred_check
      _
    $region3: #{tpu_custom_call.1} parent=1 // pred_check_branch
      %12 = sbr.rel (0) target = $region5
    $region4: #{tpu_custom_call.1} parent=1 // pred_region
      %s14 = ssub.s32 128, 128
      %15 = vsyncadd [#allocation5], %s14
      %s16 = sshll.u32 [#allocation4], 4
      %s17 = int_to_ptr.vmem [resolvable:$true] %s16
      %22 = dma.hbm_to_vmem [thread:$0]  %s0, 128, %s17, [#allocation5], 64, 64, 4
    $region5: #{tpu_custom_call.1} parent=1 // pred_fallthru
      _
    // Predicated region
    $region6: #{tpu_custom_call.1} parent=1 // pred_check
      _
    $region7: #{tpu_custom_call.1} parent=1 // pred_check_branch
      %24 = sbr.rel (0) target = $region9
    $region8: #{tpu_custom_call.1} parent=1 // pred_region
      %s26 = ssub.s32 128, 128
      %27 = vsyncadd [#allocation8], %s26
      %s28 = sshll.u32 [#allocation7], 4
      %s29 = int_to_ptr.vmem [resolvable:$true] %s28
      %34 = dma.hbm_to_vmem [thread:$0]  %s1, 128, %s29, [#allocation8], 64, 64, 4
    $region9: #{tpu_custom_call.1} parent=1 // pred_fallthru
      _
    // Predicated region
    $region10: #{tpu_custom_call.1} parent=1 // pred_check
      _
    $region11: #{tpu_custom_call.1} parent=1 // pred_check_branch
      %36 = sbr.rel (0) target = $region13
    $region12: #{tpu_custom_call.1} parent=1 // pred_region
      _
    $region13: #{tpu_custom_call.1} parent=1 // pred_fallthru
      _
    // Predicated region
    $region14: #{tpu_custom_call.1} parent=1 // pred_check
      _
    $region15: #{tpu_custom_call.1} parent=1 // pred_check_branch
      %38 = sbr.rel (0) target = $region17
    $region16: #{tpu_custom_call.1} parent=1 // pred_region
      %39 = dma.done [#allocation5], 128
    $region17: #{tpu_custom_call.1} parent=1 // pred_fallthru
      _
    // Predicated region
    $region18: #{tpu_custom_call.1} parent=1 // pred_check
      _
    $region19: #{tpu_custom_call.1} parent=1 // pred_check_branch
      %41 = sbr.rel (0) target = $region21
    $region20: #{tpu_custom_call.1} parent=1 // pred_region
      %42 = dma.done [#allocation8], 128
    $region21: #{tpu_custom_call.1} parent=1 // pred_fallthru
      _
    %p43 = scmp.eq.s32.totalorder 0, 0
    // Predicated region
    $region22: #{tpu_custom_call.1} parent=1 // pred_check
      %p44 = pneg %p43
    $region23: #{tpu_custom_call.1} parent=1 // pred_check_branch
      %46 = sbr.rel (%p44) target = $region25
    $region24: #{tpu_custom_call.1} parent=1 // pred_region
      %vm47 = vcmask 1024
      %48 = vst.msk [vmem:[#allocation2] sm:$0x3] %vm47, 0.0
      %49 = vst.msk [vmem:[#allocation3] sm:$0x3] %vm47, 0.0
    $region25: #{tpu_custom_call.1} parent=1 // pred_fallthru
      _
    %v50 = vld [vmem:[#allocation4] sm:$0xf]
    %v51 = vld [vmem:[#allocation4 + $0x4] sm:$0xf]
    %v52 = vld [vmem:[#allocation7] sm:$0xf]
    %v53 = vld [vmem:[#allocation7 + $0x4] sm:$0xf]
    %v54 = vld [vmem:[%s2] sm:$0x3]
    %vm55 = vcmask 257024
    %v56 = vsel %vm55, %v52, 0.0
    %v57 = vrot.slane %v56, 4
    %v58 = vadd.f32 %v56, %v57
    %v59 = vrot.slane %v58, 2
    %v60 = vadd.f32 %v58, %v59
    %v61 = vrot.slane %v60, 1
    %v62 = vadd.f32 %v60, %v61
    %v63 = vsel %vm55, %v53, 0.0
    %v64 = vrot.slane %v63, 4
    %v65 = vadd.f32 %v63, %v64
    %v66 = vrot.slane %v65, 2
    %v67 = vadd.f32 %v65, %v66
    %v68 = vrot.slane %v67, 1
    %v69 = vadd.f32 %v67, %v68
    %v70 = vlaneseq
    %v71 = vand.u32 %v70, 127
    %v72 = vcvt.s32.f32 %v71
    %v73 = vrcp.pop 16.0
    %v74 = vmul.f32 %v72, %v73
    %v75 = vfloor.f32 %v74
    %v76 = vmul.f32 %v75, 16.0
    %v77 = vsub.f32 %v72, %v76
    %vm80 = vcmask 1041409
    %v81 = vsel %vm80, %v69, %v62
    %vm83 = vcmask 1047808
    %84 = vrot.lane.b32.xlu0 %v81, 32
    %v85 = vpop.permute.xlu0 %84
    %v86 = vsel %vm83, %v85, %v81
    %87 = vrot.lane.b32.xlu0 %v86, 32
    %v88 = vpop.permute.xlu0 %87
    %v89 = vsel %vm83, %v88, %v81
    %vm90 = vcmp.lt.f32.partialorder %v77, 15.0
    %92 = vrot.lane.b32.xlu0 %v89, 127
    %v93 = vpop.permute.xlu0 %92
    %95 = vrot.lane.b32.xlu0 %v89, 111
    %v96 = vpop.permute.xlu0 %95
    %v98 = vsel %vm90, %v93, %v96
    %v100 = vrot.slane %v98, 1
    %v103 = vadd.f32 %v62, %v98
    %v104 = vadd.f32 %v69, %v100
    %v107 = vrot.slane %v104, 7
    %v108 = vsel %vm80, %v107, %v103
    %110 = vrot.lane.b32.xlu0 %v108, 32
    %v111 = vpop.permute.xlu0 %110
    %v112 = vsel %vm83, %v111, %v108
    %113 = vrot.lane.b32.xlu0 %v112, 32
    %v114 = vpop.permute.xlu0 %113
    %v115 = vsel %vm83, %v114, %v108
    %vm116 = vcmp.lt.f32.partialorder %v77, 14.0
    %118 = vrot.lane.b32.xlu0 %v115, 126
    %v119 = vpop.permute.xlu0 %118
    %121 = vrot.lane.b32.xlu0 %v115, 110
    %v122 = vpop.permute.xlu0 %121
    %v124 = vsel %vm116, %v119, %v122
    %v126 = vrot.slane %v124, 1
    %v129 = vadd.f32 %v103, %v124
    %v130 = vadd.f32 %v104, %v126
    %v133 = vrot.slane %v130, 7
    %v134 = vsel %vm80, %v133, %v129
    %136 = vrot.lane.b32.xlu0 %v134, 32
    %v137 = vpop.permute.xlu0 %136
    %v138 = vsel %vm83, %v137, %v134
    %139 = vrot.lane.b32.xlu0 %v138, 32
    %v140 = vpop.permute.xlu0 %139
    %v141 = vsel %vm83, %v140, %v134
    %vm142 = vcmp.lt.f32.partialorder %v77, 12.0
    %144 = vrot.lane.b32.xlu0 %v141, 124
    %v145 = vpop.permute.xlu0 %144
    %147 = vrot.lane.b32.xlu0 %v141, 108
    %v148 = vpop.permute.xlu0 %147
    %v150 = vsel %vm142, %v145, %v148
    %v152 = vrot.slane %v150, 1
    %v155 = vadd.f32 %v129, %v150
    %v156 = vadd.f32 %v130, %v152
    %v159 = vrot.slane %v156, 7
    %v160 = vsel %vm80, %v159, %v155
    %162 = vrot.lane.b32.xlu0 %v160, 32
    %v163 = vpop.permute.xlu0 %162
    %v164 = vsel %vm83, %v163, %v160
    %165 = vrot.lane.b32.xlu0 %v164, 32
    %v166 = vpop.permute.xlu0 %165
    %v167 = vsel %vm83, %v166, %v160
    %vm168 = vcmp.lt.f32.partialorder %v77, 8.0
    %170 = vrot.lane.b32.xlu0 %v167, 120
    %v171 = vpop.permute.xlu0 %170
    %173 = vrot.lane.b32.xlu0 %v167, 104
    %v174 = vpop.permute.xlu0 %173
    %v176 = vsel %vm168, %v171, %v174
    %v178 = vrot.slane %v176, 1
    %v181 = vadd.f32 %v155, %v176
    %v182 = vadd.f32 %v156, %v178
    %v183 = vmul.f32 %v181, 0.015625
    %v184 = vmul.f32 %v182, 0.015625
    %v185 = vlaneseq
    %v186 = vshrl.u32 %v185, 7
    %v187 = vsub.s32 0, %v186
    %v188 = vrot.slane %v183, %v187
    %v189 = vlaneseq
    %v190 = vshrl.u32 %v189, 7
    %v191 = vsub.s32 0, %v190
    %v192 = vrot.slane %v184, %v191
    %v193 = vsub.f32 %v52, %v188
    %v194 = vsub.f32 %v53, %v192
    %v195 = vmul.f32 %v193, %v193
    %v196 = vmul.f32 %v194, %v194
    %v197 = vsel %vm55, %v195, 0.0
    %v198 = vrot.slane %v197, 4
    %v199 = vadd.f32 %v197, %v198
    %v200 = vrot.slane %v199, 2
    %v201 = vadd.f32 %v199, %v200
    %v202 = vrot.slane %v201, 1
    %v203 = vadd.f32 %v201, %v202
    %v204 = vsel %vm55, %v196, 0.0
    %v205 = vrot.slane %v204, 4
    %v206 = vadd.f32 %v204, %v205
    %v207 = vrot.slane %v206, 2
    %v208 = vadd.f32 %v206, %v207
    %v209 = vrot.slane %v208, 1
    %v210 = vadd.f32 %v208, %v209
    %v213 = vsel %vm80, %v210, %v203
    %215 = vrot.lane.b32.xlu0 %v213, 32
    %v216 = vpop.permute.xlu0 %215
    %v217 = vsel %vm83, %v216, %v213
    %218 = vrot.lane.b32.xlu0 %v217, 32
    %v219 = vpop.permute.xlu0 %218
    %v220 = vsel %vm83, %v219, %v213
    %222 = vrot.lane.b32.xlu0 %v220, 127
    %v223 = vpop.permute.xlu0 %222
    %225 = vrot.lane.b32.xlu0 %v220, 111
    %v226 = vpop.permute.xlu0 %225
    %v228 = vsel %vm90, %v223, %v226
    %v230 = vrot.slane %v228, 1
    %v233 = vadd.f32 %v203, %v228
    %v234 = vadd.f32 %v210, %v230
    %v237 = vrot.slane %v234, 7
    %v238 = vsel %vm80, %v237, %v233
    %240 = vrot.lane.b32.xlu0 %v238, 32
    %v241 = vpop.permute.xlu0 %240
    %v242 = vsel %vm83, %v241, %v238
    %243 = vrot.lane.b32.xlu0 %v242, 32
    %v244 = vpop.permute.xlu0 %243
    %v245 = vsel %vm83, %v244, %v238
    %247 = vrot.lane.b32.xlu0 %v245, 126
    %v248 = vpop.permute.xlu0 %247
    %250 = vrot.lane.b32.xlu0 %v245, 110
    %v251 = vpop.permute.xlu0 %250
    %v253 = vsel %vm116, %v248, %v251
    %v255 = vrot.slane %v253, 1
    %v258 = vadd.f32 %v233, %v253
    %v259 = vadd.f32 %v234, %v255
    %v262 = vrot.slane %v259, 7
    %v263 = vsel %vm80, %v262, %v258
    %265 = vrot.lane.b32.xlu0 %v263, 32
    %v266 = vpop.permute.xlu0 %265
    %v267 = vsel %vm83, %v266, %v263
    %268 = vrot.lane.b32.xlu0 %v267, 32
    %v269 = vpop.permute.xlu0 %268
    %v270 = vsel %vm83, %v269, %v263
    %272 = vrot.lane.b32.xlu0 %v270, 124
    %v273 = vpop.permute.xlu0 %272
    %275 = vrot.lane.b32.xlu0 %v270, 108
    %v276 = vpop.permute.xlu0 %275
    %v278 = vsel %vm142, %v273, %v276
    %v280 = vrot.slane %v278, 1
    %v283 = vadd.f32 %v258, %v278
    %v284 = vadd.f32 %v259, %v280
    %v287 = vrot.slane %v284, 7
    %v288 = vsel %vm80, %v287, %v283
    %290 = vrot.lane.b32.xlu0 %v288, 32
    %v291 = vpop.permute.xlu0 %290
    %v292 = vsel %vm83, %v291, %v288
    %293 = vrot.lane.b32.xlu0 %v292, 32
    %v294 = vpop.permute.xlu0 %293
    %v295 = vsel %vm83, %v294, %v288
    %297 = vrot.lane.b32.xlu0 %v295, 120
    %v298 = vpop.permute.xlu0 %297
    %300 = vrot.lane.b32.xlu0 %v295, 104
    %v301 = vpop.permute.xlu0 %300
    %v303 = vsel %vm168, %v298, %v301
    %v305 = vrot.slane %v303, 1
    %v308 = vadd.f32 %v283, %v303
    %v309 = vadd.f32 %v284, %v305
    %v310 = vmul.f32 %v308, 0.015873017
    %v311 = vmul.f32 %v309, 0.015873017
    %v312 = vadd.f32 %v310, 1e-06
    %v313 = vadd.f32 %v311, 1e-06
    %v314 = vrsqrt.pop %v312
    %v315 = vrsqrt.pop %v313
    %v316 = vlaneseq
    %v317 = vshrl.u32 %v316, 7
    %v318 = vsub.s32 0, %v317
    %v319 = vrot.slane %v314, %v318
    %v320 = vlaneseq
    %v321 = vshrl.u32 %v320, 7
    %v322 = vsub.s32 0, %v321
    %v323 = vrot.slane %v315, %v322
    %v324 = vmul.f32 %v193, %v319
    %v325 = vmul.f32 %v194, %v323
    %v326 = vsub.f32 %v50, %v324
    %v327 = vsub.f32 %v51, %v325
    %v328 = vmul.f32 %v326, %v326
    %v329 = vmul.f32 %v327, %v327
    %v330 = vsel %vm55, %v328, 0.0
    %v331 = vrot.slane %v330, 4
    %v332 = vadd.f32 %v330, %v331
    %v333 = vrot.slane %v332, 2
    %v334 = vadd.f32 %v332, %v333
    %v335 = vrot.slane %v334, 1
    %v336 = vadd.f32 %v334, %v335
    %v337 = vsel %vm55, %v329, 0.0
    %v338 = vrot.slane %v337, 4
    %v339 = vadd.f32 %v337, %v338
    %v340 = vrot.slane %v339, 2
    %v341 = vadd.f32 %v339, %v340
    %v342 = vrot.slane %v341, 1
    %v343 = vadd.f32 %v341, %v342
    %v344 = vmul.f32 %v336, 0.25
    %v345 = vmul.f32 %v343, 0.25
    %v346 = vld [vmem:[#allocation2] sm:$0x3]
    %v348 = vrot.slane %v54, 1
    %v351 = vmul.f32 %v344, %v54
    %v352 = vmul.f32 %v345, %v348
    %v355 = vrot.slane %v352, 7
    %v356 = vsel %vm80, %v355, %v351
    %vm358 = vcmask 254976
    %v359 = vsel %vm358, %v356, 0.0
    %360 = vadd.xlane.f32.xlu0 %v359
    %v361 = vpop.xlane.xlu0 %360
    %v362 = vadd.f32 %v346, %v361
    %vm363 = vcmask 1024
    %364 = vst.msk [vmem:[#allocation2] sm:$0x3] %vm363, %v362
    %v365 = vld [vmem:[#allocation3] sm:$0x3]
    %v366 = vsel %vm358, %v54, 0.0
    %367 = vadd.xlane.f32.xlu0 %v366
    %v368 = vpop.xlane.xlu0 %367
    %v369 = vadd.f32 %v365, %v368
    %370 = vst.msk [vmem:[#allocation3] sm:$0x3] %vm363, %v369
    // Predicated region
    $region26: #{tpu_custom_call.1} parent=1 // pred_check
      %p371 = pneg %p43
    $region27: #{tpu_custom_call.1} parent=1 // pred_check_branch
      %373 = sbr.rel (%p371) target = $region29
    $region28: #{tpu_custom_call.1} parent=1 // pred_region
      %v374 = vld [vmem:[#allocation2] sm:$0x3]
      %v375 = vld [vmem:[#allocation3] sm:$0x3]
      %vm376 = vcmp.gt.f32.partialorder %v375, 0.0
      %v377 = vsel %vm376, %v375, 1.0
      %v378 = vrcp.pop %v377
      %v379 = vmul.f32 %v374, %v378
      %v380 = vsel %vm376, %v379, 0.0
      %v381 = vsel %vm376, 1.0, 0.0
      %v382 = vsel %vm363, %v381, 0.0
      %v383 = vrot.slane %v382, 4
      %v384 = vadd.f32 %v382, %v383
      %v385 = vrot.slane %v384, 2
      %v386 = vadd.f32 %v384, %v385
      %v387 = vrot.slane %v386, 1
      %v388 = vadd.f32 %v386, %v387
      %v389 = vsel %vm363, %v380, 0.0
      %v390 = vrot.slane %v389, 4
      %v391 = vadd.f32 %v389, %v390
      %v392 = vrot.slane %v391, 2
      %v393 = vadd.f32 %v391, %v392
      %v394 = vrot.slane %v393, 1
      %v395 = vadd.f32 %v393, %v394
      %v396 = vmax.f32 %v388, 1.0
      %v397 = vrcp.pop %v396
      %v398 = vmul.f32 %v395, %v397
      %vm399 = vcmask 0
      %400 = vst.msk [vmem:[#allocation9] sm:$0x1] %vm399, %v398
    $region29: #{tpu_custom_call.1} parent=1 // pred_fallthru
      _
    // Predicated region
    $region30: #{tpu_custom_call.1} parent=1 // pred_check
      _
    $region31: #{tpu_custom_call.1} parent=1 // pred_check_branch
      %402 = sbr.rel (0) target = $region33
    $region32: #{tpu_custom_call.1} parent=1 // pred_region
      %s404 = ssub.s32 16, 16
      %405 = vsyncadd [#allocation6], %s404
      %s407 = sshll.u32 [#allocation9], 4
      %s408 = int_to_ptr.vmem [resolvable:$true] %s407
      %410 = dma.vmem_to_hbm [thread:$0]  %s408, 16, %s3, [#allocation6]
    $region33: #{tpu_custom_call.1} parent=1 // pred_fallthru
      _
    // Predicated region
    $region34: #{tpu_custom_call.1} parent=1 // pred_check
      _
    $region35: #{tpu_custom_call.1} parent=1 // pred_check_branch
      %412 = sbr.rel (0) target = $region37
    $region36: #{tpu_custom_call.1} parent=1 // pred_region
      %413 = dma.done [#allocation6], 16
    $region37: #{tpu_custom_call.1} parent=1 // pred_fallthru
      _
    %414 = vsyncpa [#allocation5], 1
    %415 = vsyncpa [#allocation8], 1
    %416 = vsyncpa [#allocation6], 1

</llo_original>
